<compile_context>
chip_gen: v7x
topology: tpu7x:2x2x1
jax: 0.10.0
libtpu: 0.0.40
codegen_flags: <defaults>
</compile_context>

<pallas_src>
import functools

import jax
import jax.numpy as jnp
from jax.experimental import pallas as pl
from jax.experimental.pallas import tpu as pltpu


_TN_MAX_DEFAULT = 4096              # rows per grid step (≈2 MiB logits / step)
_VMEM_LIMIT = 48 * 1024 * 1024      # scoped VMEM budget; safe on v5e/v6e/v7x


def _round_up(x, m):
    return ((x + m - 1) // m) * m


def _plan_tiles(n, tn_max):
    """Balanced row tiling. Single 8-aligned tile for small N; otherwise
    evenly-sized 128-aligned tiles (128-alignment keeps the (1, TN) token
    blocks lane-legal)."""
    n = max(int(n), 1)
    if n <= tn_max:
        tn = _round_up(n, 8)
        return tn, 1, tn
    num_tiles = -(-n // tn_max)
    tn = _round_up(-(-n // num_tiles), 128)
    return tn, num_tiles, tn * num_tiles


def _pad_tokens(tok, n, n_pad):
    flat = tok.reshape(n).astype(jnp.int32)
    if n_pad != n:
        flat = jnp.pad(flat, (0, n_pad - n))
    return flat.reshape(1, n_pad)


# ----------------------------- kernel bodies ------------------------------ #

def _gather_rows(idx_ref, hi_ref, lo_ref):
    """Exact-ish embedding row gather for one tile: one-hot(bf16) @ hi + lo.

    The one-hot values are exactly 0/1 in bf16, so each matmul returns the
    exact hi/lo plane value; the f32 sum reconstructs the original f32 table
    entry to ~2^-16 relative error (vs. multi-pass f32 MXU emulation)."""
    tn = idx_ref.shape[1]
    v_pad = hi_ref.shape[1]
    idx = idx_ref[0, :][:, None]                                   # (TN, 1)
    col = jax.lax.broadcasted_iota(jnp.int32, (tn, v_pad), 1)      # (TN, V_pad)
    onehot = (col == idx).astype(jnp.bfloat16)                     # (TN, V_pad)
    rows = (jnp.dot(onehot, hi_ref[...], preferred_element_type=jnp.float32)
            + jnp.dot(onehot, lo_ref[...], preferred_element_type=jnp.float32))
    return rows, col                                               # f32 (TN, V_pad)


def _tile_nll_sum(rows, col, tgt_ref, n_valid, lse_col):
    """Sum of NLL over the valid rows of this tile.

    rows[:, lse_col] already holds logsumexp(logits_row) (hoisted into the
    gather matrix), so nll = lse - logits[target] is a single select+reduce."""
    tn = rows.shape[0]
    tgt = tgt_ref[0, :][:, None]                                   # (TN, 1)
    sel = ((col == lse_col).astype(jnp.float32)
           - (col == tgt).astype(jnp.float32))                     # (TN, V_pad)
    nll = jnp.sum(rows * sel, axis=-1, keepdims=True)              # (TN, 1)
    rowid = jax.lax.broadcasted_iota(jnp.int32, (tn, 1), 0) + pl.program_id(0) * tn
    valid = (rowid < n_valid).astype(jnp.float32)                  # mask pad rows
    return jnp.sum(nll * valid)                                    # scalar


def _bigram_logits_kernel(idx_ref, hi_ref, lo_ref, logits_ref):
    """Logits only (inference / generate path)."""
    rows, _ = _gather_rows(idx_ref, hi_ref, lo_ref)
    logits_ref[...] = rows.astype(logits_ref.dtype)


def _bigram_loss_kernel(idx_ref, tgt_ref, hi_ref, lo_ref, logits_ref, part_ref,
                        *, n_valid, lse_col):
    """Logits + per-tile partial NLL sum (no cross-tile state → 'parallel')."""
    rows, col = _gather_rows(idx_ref, hi_ref, lo_ref)
    logits_ref[...] = rows.astype(logits_ref.dtype)
    part = _tile_nll_sum(rows, col, tgt_ref, n_valid, lse_col)
    part_ref[...] = jnp.zeros(part_ref.shape, part_ref.dtype) + part


def _bigram_loss_only_kernel(idx_ref, tgt_ref, hi_ref, lo_ref, part_ref,
                             *, n_valid, lse_col):
    """Per-tile partial NLL sum only — no logits HBM writeback at all."""
    rows, col = _gather_rows(idx_ref, hi_ref, lo_ref)
    part = _tile_nll_sum(rows, col, tgt_ref, n_valid, lse_col)
    part_ref[...] = jnp.zeros(part_ref.shape, part_ref.dtype) + part


# ------------------------------- wrappers --------------------------------- #

def _compiler_params():
    return pltpu.CompilerParams(dimension_semantics=("parallel",),
                                vmem_limit_bytes=_VMEM_LIMIT)


@functools.partial(jax.jit, static_argnames=("vocab_size", "tn_max"))
def _forward_logits(idx, hi, lo, *, vocab_size, tn_max):
    B, T = idx.shape
    N = B * T
    V_pad = hi.shape[1]
    TN, num_tiles, N_pad = _plan_tiles(N, tn_max)
    idx_row = _pad_tokens(idx, N, N_pad)

    logits_pad = pl.pallas_call(
        _bigram_logits_kernel,
        out_shape=jax.ShapeDtypeStruct((N_pad, V_pad), jnp.float32),
        grid_spec=pltpu.PrefetchScalarGridSpec(
            num_scalar_prefetch=0,
            grid=(num_tiles,),
            in_specs=[
                pl.BlockSpec((1, TN), lambda i: (0, i)),
                pl.BlockSpec((V_pad, V_pad), lambda i: (0, 0)),
                pl.BlockSpec((V_pad, V_pad), lambda i: (0, 0)),
            ],
            out_specs=pl.BlockSpec((TN, V_pad), lambda i: (i, 0)),
        ),
        compiler_params=_compiler_params(),
    )(idx_row, hi, lo)

    return logits_pad[:N, :vocab_size].reshape(B, T, vocab_size)


@functools.partial(jax.jit, static_argnames=("vocab_size", "tn_max"))
def _forward_with_loss(idx, targets, hi, lo, *, vocab_size, tn_max):
    B, T = idx.shape
    N = B * T
    V_pad = hi.shape[1]
    TN, num_tiles, N_pad = _plan_tiles(N, tn_max)
    idx_row = _pad_tokens(idx, N, N_pad)
    tgt_row = _pad_tokens(targets, N, N_pad)

    kernel = functools.partial(_bigram_loss_kernel,
                               n_valid=N, lse_col=vocab_size)

    logits_pad, partial = pl.pallas_call(
        kernel,
        out_shape=(
            jax.ShapeDtypeStruct((N_pad, V_pad), jnp.float32),
            jax.ShapeDtypeStruct((num_tiles * 8, 128), jnp.float32),
        ),
        grid_spec=pltpu.PrefetchScalarGridSpec(
            num_scalar_prefetch=0,
            grid=(num_tiles,),
            in_specs=[
                pl.BlockSpec((1, TN), lambda i: (0, i)),
                pl.BlockSpec((1, TN), lambda i: (0, i)),
                pl.BlockSpec((V_pad, V_pad), lambda i: (0, 0)),
                pl.BlockSpec((V_pad, V_pad), lambda i: (0, 0)),
            ],
            out_specs=[
                pl.BlockSpec((TN, V_pad), lambda i: (i, 0)),
                pl.BlockSpec((8, 128), lambda i: (i, 0)),
            ],
        ),
        compiler_params=_compiler_params(),
    )(idx_row, tgt_row, hi, lo)

    # Tiny host-side reduction over the per-tile partials; mean via 1/N.
    loss = jnp.sum(partial.reshape(num_tiles, 8, 128)[:, 0, 0]) * (1.0 / max(N, 1))
    logits = logits_pad[:N, :vocab_size].reshape(B, T, vocab_size)
    return logits, loss


@functools.partial(jax.jit, static_argnames=("vocab_size", "tn_max"))
def _forward_loss_only(idx, targets, hi, lo, *, vocab_size, tn_max):
    B, T = idx.shape
    N = B * T
    V_pad = hi.shape[1]
    TN, num_tiles, N_pad = _plan_tiles(N, tn_max)
    idx_row = _pad_tokens(idx, N, N_pad)
    tgt_row = _pad_tokens(targets, N, N_pad)

    kernel = functools.partial(_bigram_loss_only_kernel,
                               n_valid=N, lse_col=vocab_size)

    partial = pl.pallas_call(
        kernel,
        out_shape=jax.ShapeDtypeStruct((num_tiles * 8, 128), jnp.float32),
        grid_spec=pltpu.PrefetchScalarGridSpec(
            num_scalar_prefetch=0,
            grid=(num_tiles,),
            in_specs=[
                pl.BlockSpec((1, TN), lambda i: (0, i)),
                pl.BlockSpec((1, TN), lambda i: (0, i)),
                pl.BlockSpec((V_pad, V_pad), lambda i: (0, 0)),
                pl.BlockSpec((V_pad, V_pad), lambda i: (0, 0)),
            ],
            out_specs=pl.BlockSpec((8, 128), lambda i: (i, 0)),
        ),
        compiler_params=_compiler_params(),
    )(idx_row, tgt_row, hi, lo)

    return jnp.sum(partial.reshape(num_tiles, 8, 128)[:, 0, 0]) * (1.0 / max(N, 1))


class BigramLanguageModel:
    """JAX/Pallas port of the PyTorch BigramLanguageModel forward pass."""

    def __init__(self, vocab_size, key, tn_max=_TN_MAX_DEFAULT):
        self.vocab_size = vocab_size
        self.tn_max = int(tn_max)
        # nn.Embedding default init: N(0, 1)
        self.table = jax.random.normal(key, (vocab_size, vocab_size),
                                       dtype=jnp.float32)
        # Augmented, lane-padded gather matrix:
        #   cols [0, V)  : embedding rows (== per-token logits rows)
        #   col  V       : per-token logsumexp (loss math hoisted out of kernel)
        #   remainder    : zeros (sliced off in the wrapper)
        v_pad = _round_up(vocab_size + 1, 128)
        lse = jax.scipy.special.logsumexp(self.table, axis=-1)
        aug = jnp.zeros((v_pad, v_pad), jnp.float32)
        aug = aug.at[:vocab_size, :vocab_size].set(self.table)
        aug = aug.at[:vocab_size, vocab_size].set(lse)
        # bf16 hi/lo split: two cheap bf16 MXU matmuls reconstruct f32 rows to
        # ~2^-16 relative error instead of multi-pass f32 MXU emulation.
        hi = aug.astype(jnp.bfloat16)
        lo = (aug - hi.astype(jnp.float32)).astype(jnp.bfloat16)
        self.table_hi = hi
        self.table_lo = lo

    def forward(self, idx, targets=None, return_logits=True):
        idx = idx.astype(jnp.int32)
        if targets is None:
            logits = _forward_logits(idx, self.table_hi, self.table_lo,
                                     vocab_size=self.vocab_size,
                                     tn_max=self.tn_max)
            return logits, None
        targets = targets.astype(jnp.int32)
        if return_logits:
            return _forward_with_loss(idx, targets, self.table_hi, self.table_lo,
                                      vocab_size=self.vocab_size,
                                      tn_max=self.tn_max)
        loss = _forward_loss_only(idx, targets, self.table_hi, self.table_lo,
                                  vocab_size=self.vocab_size,
                                  tn_max=self.tn_max)
        return None, loss


def _reference(idx, targets, table):
    """Pure-JAX reference mirroring the PyTorch forward."""
    logits = table[idx]                                           # (B, T, V)
    B, T, V = logits.shape
    lf = logits.reshape(B * T, V)
    tf = targets.reshape(B * T)
    lse = jax.scipy.special.logsumexp(lf, axis=-1)
    nll = lse - lf[jnp.arange(B * T), tf]
    return logits, jnp.mean(nll)


if __name__ == "__main__":
    key = jax.random.PRNGKey(0)
    k_tab, k_idx, k_tgt, k_idx2, k_tgt2 = jax.random.split(key, 5)

    vocab_size = 65   # e.g. char-level Shakespeare vocab
    B, T = 2, 8

    model = BigramLanguageModel(vocab_size, k_tab)

    idx = jax.random.randint(k_idx, (B, T), 0, vocab_size, dtype=jnp.int32)
    targets = jax.random.randint(k_tgt, (B, T), 0, vocab_size, dtype=jnp.int32)

    logits, loss = model.forward(idx, targets)
    jax.block_until_ready((logits, loss))

    # targets=None (inference) path
    logits_only, none_loss = model.forward(idx, None)
    jax.block_until_ready(logits_only)
    assert none_loss is None

    # loss-only path (no logits HBM writeback)
    _, loss_no_logits = model.forward(idx, targets, return_logits=False)
    jax.block_until_ready(loss_no_logits)

    # correctness vs pure-JAX reference (tolerances cover the bf16 hi/lo
    # reconstruction error, bounded by ~2^-16 * |value|)
    ref_logits, ref_loss = _reference(idx, targets, model.table)
    assert logits.shape == (B, T, vocab_size)
    assert jnp.allclose(logits, ref_logits, atol=1e-4, rtol=1e-4)
    assert jnp.allclose(logits_only, ref_logits, atol=1e-4, rtol=1e-4)
    assert jnp.allclose(loss, ref_loss, atol=5e-4, rtol=1e-4)
    assert jnp.allclose(loss_no_logits, ref_loss, atol=5e-4, rtol=1e-4)

    # multi-tile grid + padded-row masking exercised at small shapes by
    # shrinking the per-tile row cap (production default is 4096 rows/tile).
    B2, T2 = 4, 160   # N = 640 -> 3 balanced tiles of 256 rows
    small_tile_model = BigramLanguageModel(vocab_size, k_tab, tn_max=256)
    idx2 = jax.random.randint(k_idx2, (B2, T2), 0, vocab_size, dtype=jnp.int32)
    tgt2 = jax.random.randint(k_tgt2, (B2, T2), 0, vocab_size, dtype=jnp.int32)
    logits2, loss2 = small_tile_model.forward(idx2, tgt2)
    jax.block_until_ready((logits2, loss2))
    ref_logits2, ref_loss2 = _reference(idx2, tgt2, small_tile_model.table)
    assert jnp.allclose(logits2, ref_logits2, atol=1e-4, rtol=1e-4)
    assert jnp.allclose(loss2, ref_loss2, atol=5e-4, rtol=1e-4)
    _, loss2b = small_tile_model.forward(idx2, tgt2, return_logits=False)
    jax.block_until_ready(loss2b)
    assert jnp.allclose(loss2b, ref_loss2, atol=5e-4, rtol=1e-4)

    print("KERNEL_OK")
</pallas_src>

<mosaic_0001>
module attributes {stable_mosaic.version = 11 : i64} {
  func.func @_bigram_loss_kernel(%arg0: i32, %arg1: memref<1x16xi32, #tpu.memory_space<vmem>>, %arg2: memref<1x16xi32, #tpu.memory_space<vmem>>, %arg3: memref<128x128xbf16, #tpu.memory_space<vmem>>, %arg4: memref<128x128xbf16, #tpu.memory_space<vmem>>, %arg5: memref<16x128xf32, #tpu.memory_space<vmem>>, %arg6: memref<8x128xf32, #tpu.memory_space<vmem>>) attributes {dimension_semantics = [#tpu.dimension_semantics<parallel>], iteration_bounds = array<i64: 1>, scalar_prefetch = 0 : i64, scratch_operands = 0 : i64, tpu.core_type = #tpu.core_type<tc>, window_params = [{transform_indices = @transform_0, window_bounds = array<i64: 1, 16>}, {transform_indices = @transform_1, window_bounds = array<i64: 1, 16>}, {pipeline_mode = #tpu.pipeline_mode<synchronous>, transform_indices = @transform_2, window_bounds = array<i64: 128, 128>}, {pipeline_mode = #tpu.pipeline_mode<synchronous>, transform_indices = @transform_3, window_bounds = array<i64: 128, 128>}, {transform_indices = @transform_4, window_bounds = array<i64: 16, 128>}, {transform_indices = @transform_5, window_bounds = array<i64: 8, 128>}]} {
    %c0 = arith.constant 0 : index
    %c0_0 = arith.constant 0 : index
    %0 = vector.load %arg1[%c0, %c0_0] : memref<1x16xi32, #tpu.memory_space<vmem>>, vector<1x16xi32>
    %1 = vector.shape_cast %0 : vector<1x16xi32> to vector<16xi32>
    %2 = vector.shape_cast %1 : vector<16xi32> to vector<16x1xi32>
    %3 = tpu.iota {dimensions = array<i32: 1>} : vector<16x128xi32>
    %4 = vector.broadcast %2 : vector<16x1xi32> to vector<16x128xi32>
    %5 = arith.cmpi eq, %3, %4 : vector<16x128xi32>
    %6 = arith.extui %5 : vector<16x128xi1> to vector<16x128xi32>
    %7 = arith.sitofp %6 : vector<16x128xi32> to vector<16x128xf32>
    %8 = arith.truncf %7 : vector<16x128xf32> to vector<16x128xbf16>
    %c0_1 = arith.constant 0 : index
    %c0_2 = arith.constant 0 : index
    %9 = vector.load %arg3[%c0_1, %c0_2] : memref<128x128xbf16, #tpu.memory_space<vmem>>, vector<128x128xbf16>
    %cst = arith.constant dense<0.000000e+00> : vector<16x128xf32>
    %10 = tpu.matmul %8, %9, %cst {dimension_numbers = #tpu.dot_dimension_numbers<[1], [0], [0], [1], [0, 0, 1, 1], [], []>} : vector<16x128xbf16>, vector<128x128xbf16>, vector<16x128xf32> -> vector<16x128xf32>
    %c0_3 = arith.constant 0 : index
    %c0_4 = arith.constant 0 : index
    %11 = vector.load %arg4[%c0_3, %c0_4] : memref<128x128xbf16, #tpu.memory_space<vmem>>, vector<128x128xbf16>
    %cst_5 = arith.constant dense<0.000000e+00> : vector<16x128xf32>
    %12 = tpu.matmul %8, %11, %cst_5 {dimension_numbers = #tpu.dot_dimension_numbers<[1], [0], [0], [1], [0, 0, 1, 1], [], []>} : vector<16x128xbf16>, vector<128x128xbf16>, vector<16x128xf32> -> vector<16x128xf32>
    %13 = arith.addf %10, %12 : vector<16x128xf32>
    %c0_6 = arith.constant 0 : index
    %c0_7 = arith.constant 0 : index
    %14 = vector.load %arg5[%c0_6, %c0_7] : memref<16x128xf32, #tpu.memory_space<vmem>>, vector<16x128xf32>
    tpu.vector_store %arg5[%c0_6, %c0_7], %13 {strides = array<i32>} : memref<16x128xf32, #tpu.memory_space<vmem>>, vector<16x128xf32>,
    %c0_8 = arith.constant 0 : index
    %c0_9 = arith.constant 0 : index
    %15 = vector.load %arg2[%c0_8, %c0_9] : memref<1x16xi32, #tpu.memory_space<vmem>>, vector<1x16xi32>
    %16 = vector.shape_cast %15 : vector<1x16xi32> to vector<16xi32>
    %17 = vector.shape_cast %16 : vector<16xi32> to vector<16x1xi32>
    %c65_i32 = arith.constant 65 : i32
    %18 = vector.broadcast %c65_i32 : i32 to vector<16x128xi32>
    %19 = arith.cmpi eq, %3, %18 : vector<16x128xi32>
    %20 = arith.extui %19 : vector<16x128xi1> to vector<16x128xi32>
    %21 = arith.sitofp %20 : vector<16x128xi32> to vector<16x128xf32>
    %22 = vector.broadcast %17 : vector<16x1xi32> to vector<16x128xi32>
    %23 = arith.cmpi eq, %3, %22 : vector<16x128xi32>
    %24 = arith.extui %23 : vector<16x128xi1> to vector<16x128xi32>
    %25 = arith.sitofp %24 : vector<16x128xi32> to vector<16x128xf32>
    %26 = arith.subf %21, %25 : vector<16x128xf32>
    %27 = arith.mulf %13, %26 : vector<16x128xf32>
    %cst_10 = arith.constant dense<0.000000e+00> : vector<16xf32>
    %28 = vector.multi_reduction <add>, %27, %cst_10 [1] : vector<16x128xf32> to vector<16xf32>
    %29 = vector.shape_cast %28 : vector<16xf32> to vector<16x1xf32>
    %30 = tpu.iota {dimensions = array<i32: 0>} : vector<16x1xi32>
    %c16_i32 = arith.constant 16 : i32
    %31 = arith.muli %arg0, %c16_i32 : i32
    %32 = vector.broadcast %31 : i32 to vector<16x1xi32>
    %33 = arith.addi %30, %32 : vector<16x1xi32>
    %c16_i32_11 = arith.constant 16 : i32
    %34 = vector.broadcast %c16_i32_11 : i32 to vector<16x1xi32>
    %35 = arith.cmpi slt, %33, %34 : vector<16x1xi32>
    %36 = arith.extui %35 : vector<16x1xi1> to vector<16x1xi32>
    %37 = arith.sitofp %36 : vector<16x1xi32> to vector<16x1xf32>
    %38 = arith.mulf %29, %37 : vector<16x1xf32>
    %39 = vector.shape_cast %38 : vector<16x1xf32> to vector<1x16x1xf32>
    %cst_12 = arith.constant dense<0.000000e+00> : vector<1xf32>
    %40 = vector.multi_reduction <add>, %39, %cst_12 [1, 2] : vector<1x16x1xf32> to vector<1xf32>
    %41 = vector.shape_cast %40 : vector<1xf32> to vector<1x1x1xf32>
    %42 = vector.extract %41[0, 0, 0] : f32 from vector<1x1x1xf32>
    %cst_13 = arith.constant 0.000000e+00 : f32
    %43 = vector.broadcast %cst_13 : f32 to vector<8x128xf32>
    %44 = vector.broadcast %42 : f32 to vector<8x128xf32>
    %45 = arith.addf %43, %44 : vector<8x128xf32>
    %c0_14 = arith.constant 0 : index
    %c0_15 = arith.constant 0 : index
    %46 = vector.load %arg6[%c0_14, %c0_15] : memref<8x128xf32, #tpu.memory_space<vmem>>, vector<8x128xf32>
    tpu.vector_store %arg6[%c0_14, %c0_15], %45 {strides = array<i32>} : memref<8x128xf32, #tpu.memory_space<vmem>>, vector<8x128xf32>,
    return
  }
  func.func @transform_0(%arg0: i32) -> (i32, i32) {
    %c0_i32 = arith.constant 0 : i32
    %c0_i32_0 = arith.constant 0 : i32
    return %c0_i32, %arg0 : i32, i32
  }
  func.func @transform_1(%arg0: i32) -> (i32, i32) {
    %c0_i32 = arith.constant 0 : i32
    %c0_i32_0 = arith.constant 0 : i32
    return %c0_i32, %arg0 : i32, i32
  }
  func.func @transform_2(%arg0: i32) -> (i32, i32) {
    %c0_i32 = arith.constant 0 : i32
    %c0_i32_0 = arith.constant 0 : i32
    %c0_i32_1 = arith.constant 0 : i32
    return %c0_i32, %c0_i32_0 : i32, i32
  }
  func.func @transform_3(%arg0: i32) -> (i32, i32) {
    %c0_i32 = arith.constant 0 : i32
    %c0_i32_0 = arith.constant 0 : i32
    %c0_i32_1 = arith.constant 0 : i32
    return %c0_i32, %c0_i32_0 : i32, i32
  }
  func.func @transform_4(%arg0: i32) -> (i32, i32) {
    %c0_i32 = arith.constant 0 : i32
    %c0_i32_0 = arith.constant 0 : i32
    return %arg0, %c0_i32 : i32, i32
  }
  func.func @transform_5(%arg0: i32) -> (i32, i32) {
    %c0_i32 = arith.constant 0 : i32
    %c0_i32_0 = arith.constant 0 : i32
    return %arg0, %c0_i32 : i32, i32
  }
}

</mosaic_0001>

<llo_original>
// kernel: _forward_with_loss.1
$region0: #{_forward_with_loss.1}
  #allocation0 [shape = 'u32[]', space=smem, size = 0x4, offset = 0x4, fixed_abs, tag = 'smem constant byte address 0x4 - core index']
  #allocation1 [shape = 'u32[144,128]{1,0:T(1,128)}', space=vmem, size = 0x12000, scoped, tag = 'internal scratch']
  %s0 = inlined_call_operand.vmem [shape: s32[1,16], index: 0, kind: input, shape index: {}]
  %s1 = inlined_call_operand.vmem [shape: s32[1,16], index: 1, kind: input, shape index: {}]
  %s2 = inlined_call_operand.hbm [shape: bf16[128,128], index: 2, kind: input, shape index: {}]
  %s3 = inlined_call_operand.hbm [shape: bf16[128,128], index: 3, kind: input, shape index: {}]
  %s4 = inlined_call_operand.vmem [shape: f32[16,128], index: 4, kind: output, shape index: {0}]
  %s5 = inlined_call_operand.vmem [shape: f32[8,128], index: 5, kind: output, shape index: {1}]
  %6 = xla_tuple %s4, %s5
  %s7 = sld [smem:[#allocation0]]
  $region42: #{_forward_with_loss.1} parent=0
    _
  %s9 = ssub.s32 1, %s7
  %s10 = scalar_select 0, %s9, %s7
  $region1: #{_forward_with_loss.1} parent=0
    #allocation2 [shape = 'u8[32768]{0}', space=vmem, size = 0x8000, scoped, tag = 'input window, operand 2, single buffered']
    #allocation3 [shape = 's32[1]{0}', space=sflag, size = 0x4, scoped, tag = 'scoped memory for _forward_with_loss.1']
    #allocation4 [shape = 'u8[32768]{0}', space=vmem, size = 0x8000, scoped, tag = 'input window, operand 3, single buffered']
    #allocation5 [shape = 's32[1]{0}', space=sflag, size = 0x4, scoped, tag = 'scoped memory for _forward_with_loss.1']
    %11 = vsyncpa [#allocation3], 0
    %12 = vsyncpa [#allocation5], 0
    // Predicated region
    $region2: #{_forward_with_loss.1} parent=1 // pred_check
      _
    $region3: #{_forward_with_loss.1} parent=1 // pred_check_branch
      %14 = sbr.rel (0) target = $region5
    $region4: #{_forward_with_loss.1} parent=1 // pred_region
      _
    $region5: #{_forward_with_loss.1} parent=1 // pred_fallthru
      _
    // Predicated region
    $region6: #{_forward_with_loss.1} parent=1 // pred_check
      _
    $region7: #{_forward_with_loss.1} parent=1 // pred_check_branch
      %16 = sbr.rel (0) target = $region9
    $region8: #{_forward_with_loss.1} parent=1 // pred_region
      _
    $region9: #{_forward_with_loss.1} parent=1 // pred_fallthru
      _
    // Predicated region
    $region10: #{_forward_with_loss.1} parent=1 // pred_check
      _
    $region11: #{_forward_with_loss.1} parent=1 // pred_check_branch
      %18 = sbr.rel (0) target = $region13
    $region12: #{_forward_with_loss.1} parent=1 // pred_region
      %s20 = ssub.s32 1024, 1024
      %21 = vsyncadd [#allocation3], %s20
      %s22 = sshll.u32 [#allocation2], 4
      %s23 = int_to_ptr.vmem [resolvable:$true] %s22
      %28 = dma.hbm_to_vmem [thread:$0]  %s2, 1024, %s23, [#allocation3], 64, 64, 4
    $region13: #{_forward_with_loss.1} parent=1 // pred_fallthru
      _
    // Predicated region
    $region14: #{_forward_with_loss.1} parent=1 // pred_check
      _
    $region15: #{_forward_with_loss.1} parent=1 // pred_check_branch
      %30 = sbr.rel (0) target = $region17
    $region16: #{_forward_with_loss.1} parent=1 // pred_region
      %s32 = ssub.s32 1024, 1024
      %33 = vsyncadd [#allocation5], %s32
      %s34 = sshll.u32 [#allocation4], 4
      %s35 = int_to_ptr.vmem [resolvable:$true] %s34
      %40 = dma.hbm_to_vmem [thread:$0]  %s3, 1024, %s35, [#allocation5], 64, 64, 4
    $region17: #{_forward_with_loss.1} parent=1 // pred_fallthru
      _
    // Predicated region
    $region18: #{_forward_with_loss.1} parent=1 // pred_check
      _
    $region19: #{_forward_with_loss.1} parent=1 // pred_check_branch
      %42 = sbr.rel (0) target = $region21
    $region20: #{_forward_with_loss.1} parent=1 // pred_region
      %43 = dma.done [#allocation3], 1024
    $region21: #{_forward_with_loss.1} parent=1 // pred_fallthru
      _
    // Predicated region
    $region22: #{_forward_with_loss.1} parent=1 // pred_check
      _
    $region23: #{_forward_with_loss.1} parent=1 // pred_check_branch
      %45 = sbr.rel (0) target = $region25
    $region24: #{_forward_with_loss.1} parent=1 // pred_region
      %46 = dma.done [#allocation5], 1024
    $region25: #{_forward_with_loss.1} parent=1 // pred_fallthru
      _
    %v48 = vld [vmem:[%s0] sm:$0x1]
    %v49 = vlaneseq
    %v50 = vshrl.u32 %v49, 7
    %v51 = vsub.s32 0, %v50
    %v52 = vrot.slane %v48, %v51
    %54 = vbcast.lane.b32.xlu0 %v52, 256
    %v55 = vpop.permute.xlu0 %54
    %s57 = sor.u32 256, 8
    %58 = vbcast.lane.b32.xlu0 %v52, %s57
    %v59 = vpop.permute.xlu0 %58
    %v60 = vlaneseq
    %v61 = vand.u32 %v60, 127
    %vm62 = vcmp.eq.s32.totalorder %v61, %v55
    %vm63 = vcmp.eq.s32.totalorder %v61, %v59
    %v64 = vsel %vm62, 1, 0
    %v65 = vsel %vm63, 1, 0
    %v66 = vcvt.s32.f32 %v64
    %v67 = vcvt.s32.f32 %v65
    %v68 = vpack.c.bf16 %v67, %v66
    %v69 = vld [vmem:[#allocation2] sm:$0xf]
    %v70 = vld [vmem:[#allocation2 + $0x4] sm:$0xf]
    %v71 = vld [vmem:[#allocation2 + $0x8] sm:$0xf]
    %v72 = vld [vmem:[#allocation2 + $0xc] sm:$0xf]
    %v73 = vld [vmem:[#allocation2 + $0x10] sm:$0xf]
    %v74 = vld [vmem:[#allocation2 + $0x14] sm:$0xf]
    %v75 = vld [vmem:[#allocation2 + $0x18] sm:$0xf]
    %v76 = vld [vmem:[#allocation2 + $0x1c] sm:$0xf]
    %v77 = vld [vmem:[#allocation2 + $0x20] sm:$0xf]
    %v78 = vld [vmem:[#allocation2 + $0x24] sm:$0xf]
    %v79 = vld [vmem:[#allocation2 + $0x28] sm:$0xf]
    %v80 = vld [vmem:[#allocation2 + $0x2c] sm:$0xf]
    %v81 = vld [vmem:[#allocation2 + $0x30] sm:$0xf]
    %v82 = vld [vmem:[#allocation2 + $0x34] sm:$0xf]
    %v83 = vld [vmem:[#allocation2 + $0x38] sm:$0xf]
    %v84 = vld [vmem:[#allocation2 + $0x3c] sm:$0xf]
    %v85 = vld [vmem:[#allocation4] sm:$0xf]
    %v86 = vld [vmem:[#allocation4 + $0x4] sm:$0xf]
    %v87 = vld [vmem:[#allocation4 + $0x8] sm:$0xf]
    %v88 = vld [vmem:[#allocation4 + $0xc] sm:$0xf]
    %v89 = vld [vmem:[#allocation4 + $0x10] sm:$0xf]
    %v90 = vld [vmem:[#allocation4 + $0x14] sm:$0xf]
    %v91 = vld [vmem:[#allocation4 + $0x18] sm:$0xf]
    %v92 = vld [vmem:[#allocation4 + $0x1c] sm:$0xf]
    %v93 = vld [vmem:[#allocation4 + $0x20] sm:$0xf]
    %v94 = vld [vmem:[#allocation4 + $0x24] sm:$0xf]
    %v95 = vld [vmem:[#allocation4 + $0x28] sm:$0xf]
    %v96 = vld [vmem:[#allocation4 + $0x2c] sm:$0xf]
    %v97 = vld [vmem:[#allocation4 + $0x30] sm:$0xf]
    %v98 = vld [vmem:[#allocation4 + $0x34] sm:$0xf]
    %v99 = vld [vmem:[#allocation4 + $0x38] sm:$0xf]
    %v100 = vld [vmem:[#allocation4 + $0x3c] sm:$0xf]
    %v117 = vunpack.c.l.b16 %v85
    %v118 = vunpack.c.l.b16 %v86
    %v119 = vunpack.c.l.b16 %v87
    %v120 = vunpack.c.l.b16 %v88
    %v121 = vunpack.c.l.b16 %v89
    %v122 = vunpack.c.l.b16 %v90
    %v123 = vunpack.c.l.b16 %v91
    %v124 = vunpack.c.l.b16 %v92
    %v125 = vunpack.c.l.b16 %v93
    %v126 = vunpack.c.l.b16 %v94
    %v127 = vunpack.c.l.b16 %v95
    %v128 = vunpack.c.l.b16 %v96
    %v129 = vunpack.c.l.b16 %v97
    %v130 = vunpack.c.l.b16 %v98
    %v131 = vunpack.c.l.b16 %v99
    %v132 = vunpack.c.l.b16 %v100
    %v133 = vpack.c.b16 %v118, %v117
    %v134 = vpack.c.b16 %v120, %v119
    %v135 = vpack.c.b16 %v122, %v121
    %v136 = vpack.c.b16 %v124, %v123
    %v137 = vpack.c.b16 %v126, %v125
    %v138 = vpack.c.b16 %v128, %v127
    %v139 = vpack.c.b16 %v130, %v129
    %v140 = vpack.c.b16 %v132, %v131
    %149 = vmatprep.subr.bf16.mxu0 0
    %150 = vmatpush1.bf16.msra.mxu0 %v133
    %151 = vmatprep.subr.bf16.mxu0 0
    %152 = vmatpush1.bf16.msra.mxu0 %v134
    %153 = vmatprep.subr.bf16.mxu0 0
    %154 = vmatpush1.bf16.msra.mxu0 %v135
    %155 = vmatprep.subr.bf16.mxu0 0
    %156 = vmatpush1.bf16.msra.mxu0 %v136
    %157 = vmatprep.subr.bf16.mxu0 0
    %158 = vmatpush1.bf16.msra.mxu0 %v137
    %159 = vmatprep.subr.bf16.mxu0 0
    %160 = vmatpush1.bf16.msra.mxu0 %v138
    %161 = vmatprep.subr.bf16.mxu0 0
    %162 = vmatpush1.bf16.msra.mxu0 %v139
    %163 = vmatprep.subr.bf16.mxu0 0
    %164 = vmatpush1.bf16.msra.mxu0 %v140
    %165 = vmatprep.subr.bf16.mxu0 0
    %166 = vmatpush1.bf16.msra.mxu0 0
    %167 = vmatprep.subr.bf16.mxu0 0
    %168 = vmatpush1.bf16.msra.mxu0 0
    %169 = vmatprep.subr.bf16.mxu0 0
    %170 = vmatpush1.bf16.msra.mxu0 0
    %171 = vmatprep.subr.bf16.mxu0 0
    %172 = vmatpush1.bf16.msra.mxu0 0
    %173 = vmatprep.subr.bf16.mxu0 0
    %174 = vmatpush1.bf16.msra.mxu0 0
    %175 = vmatprep.subr.bf16.mxu0 0
    %176 = vmatpush1.bf16.msra.mxu0 0
    %177 = vmatprep.subr.bf16.mxu0 0
    %178 = vmatpush1.bf16.msra.mxu0 0
    %179 = vmatprep.subr.bf16.mxu0 0
    %180 = vmatpush1.bf16.msra.mxu0 0
    %181 = vmatprep.mubr.bf16.mxu0 0
    %182 = vmatmul.mubr.bf16.gmra.mrb[0].mxu0 %v68
    %v183 = vpop.f32.mrb[0].mxu0
    %v184 = vadd.f32 0.0, %v183
    %v185 = vpop.f32.mrb[0].mxu0
    %v186 = vpop.f32.mrb[0].mxu0
    %v187 = vadd.f32 0.0, %v186
    %v188 = vpop.f32.mrb[0].mxu0
    %189 = vdwg.mxu0
    %v206 = vunpack.c.l.b16 %v69
    %v207 = vunpack.c.l.b16 %v70
    %v208 = vunpack.c.l.b16 %v71
    %v209 = vunpack.c.l.b16 %v72
    %v210 = vunpack.c.l.b16 %v73
    %v211 = vunpack.c.l.b16 %v74
    %v212 = vunpack.c.l.b16 %v75
    %v213 = vunpack.c.l.b16 %v76
    %v214 = vunpack.c.l.b16 %v77
    %v215 = vunpack.c.l.b16 %v78
    %v216 = vunpack.c.l.b16 %v79
    %v217 = vunpack.c.l.b16 %v80
    %v218 = vunpack.c.l.b16 %v81
    %v219 = vunpack.c.l.b16 %v82
    %v220 = vunpack.c.l.b16 %v83
    %v221 = vunpack.c.l.b16 %v84
    %v222 = vpack.c.b16 %v207, %v206
    %v223 = vpack.c.b16 %v209, %v208
    %v224 = vpack.c.b16 %v211, %v210
    %v225 = vpack.c.b16 %v213, %v212
    %v226 = vpack.c.b16 %v215, %v214
    %v227 = vpack.c.b16 %v217, %v216
    %v228 = vpack.c.b16 %v219, %v218
    %v229 = vpack.c.b16 %v221, %v220
    %238 = vmatprep.subr.bf16.mxu0 0
    %239 = vmatpush1.bf16.msra.mxu0 %v222
    %240 = vmatprep.subr.bf16.mxu0 0
    %241 = vmatpush1.bf16.msra.mxu0 %v223
    %242 = vmatprep.subr.bf16.mxu0 0
    %243 = vmatpush1.bf16.msra.mxu0 %v224
    %244 = vmatprep.subr.bf16.mxu0 0
    %245 = vmatpush1.bf16.msra.mxu0 %v225
    %246 = vmatprep.subr.bf16.mxu0 0
    %247 = vmatpush1.bf16.msra.mxu0 %v226
    %248 = vmatprep.subr.bf16.mxu0 0
    %249 = vmatpush1.bf16.msra.mxu0 %v227
    %250 = vmatprep.subr.bf16.mxu0 0
    %251 = vmatpush1.bf16.msra.mxu0 %v228
    %252 = vmatprep.subr.bf16.mxu0 0
    %253 = vmatpush1.bf16.msra.mxu0 %v229
    %254 = vmatprep.subr.bf16.mxu0 0
    %255 = vmatpush1.bf16.msra.mxu0 0
    %256 = vmatprep.subr.bf16.mxu0 0
    %257 = vmatpush1.bf16.msra.mxu0 0
    %258 = vmatprep.subr.bf16.mxu0 0
    %259 = vmatpush1.bf16.msra.mxu0 0
    %260 = vmatprep.subr.bf16.mxu0 0
    %261 = vmatpush1.bf16.msra.mxu0 0
    %262 = vmatprep.subr.bf16.mxu0 0
    %263 = vmatpush1.bf16.msra.mxu0 0
    %264 = vmatprep.subr.bf16.mxu0 0
    %265 = vmatpush1.bf16.msra.mxu0 0
    %266 = vmatprep.subr.bf16.mxu0 0
    %267 = vmatpush1.bf16.msra.mxu0 0
    %268 = vmatprep.subr.bf16.mxu0 0
    %269 = vmatpush1.bf16.msra.mxu0 0
    %270 = vmatprep.mubr.bf16.mxu0 0
    %271 = vmatmul.mubr.bf16.gmra.mrb[0].mxu0 %v68
    %v272 = vpop.f32.mrb[0].mxu0
    %v273 = vadd.f32 %v184, %v272
    %v274 = vpop.f32.mrb[0].mxu0
    %v275 = vpop.f32.mrb[0].mxu0
    %v276 = vadd.f32 %v187, %v275
    %v277 = vpop.f32.mrb[0].mxu0
    %278 = vdwg.mxu0
    %279 = vst [vmem:[%s4] sm:$0xff] %v273
    %280 = vst [vmem:[%s4 + $0x8] sm:$0xff] %v276
    %v281 = vld [vmem:[%s1] sm:$0x1]
    %v282 = vlaneseq
    %v283 = vshrl.u32 %v282, 7
    %v284 = vsub.s32 0, %v283
    %v285 = vrot.slane %v281, %v284
    %287 = vbcast.lane.b32.xlu0 %v285, 256
    %v288 = vpop.permute.xlu0 %287
    %s290 = sor.u32 256, 8
    %291 = vbcast.lane.b32.xlu0 %v285, %s290
    %v292 = vpop.permute.xlu0 %291
    %vm293 = vcmp.eq.s32.totalorder %v61, 65
    %v294 = vsel %vm293, 1, 0
    %v295 = vcvt.s32.f32 %v294
    %vm296 = vcmp.eq.s32.totalorder %v61, %v288
    %vm297 = vcmp.eq.s32.totalorder %v61, %v292
    %v298 = vsel %vm296, 1, 0
    %v299 = vsel %vm297, 1, 0
    %v300 = vcvt.s32.f32 %v298
    %v301 = vcvt.s32.f32 %v299
    %v302 = vsub.f32 %v295, %v300
    %v303 = vsub.f32 %v295, %v301
    %v304 = vmul.f32 %v273, %v302
    %v305 = vmul.f32 %v276, %v303
    %306 = vadd.xlane.f32.xlu0 %v304
    %v307 = vpop.xlane.xlu0 %306
    %308 = vadd.xlane.f32.xlu0 %v305
    %v309 = vpop.xlane.xlu0 %308
    %v310 = vlaneseq
    %v311 = vshrl.u32 %v310, 7
    %v312 = vadd.s32 %v311, 8
    %s313 = smul.u32 0, 16
    %v314 = vstv %s313
    %v315 = vadd.s32 %v311, %v314
    %v316 = vadd.s32 %v312, %v314
    %vm317 = vcmp.lt.s32.totalorder %v315, 16
    %vm318 = vcmp.lt.s32.totalorder %v316, 16
    %v319 = vsel %vm317, 1, 0
    %v320 = vsel %vm318, 1, 0
    %v321 = vcvt.s32.f32 %v319
    %v322 = vcvt.s32.f32 %v320
    %v323 = vmul.f32 %v307, %v321
    %v324 = vmul.f32 %v309, %v322
    %vm325 = vcmask 7168
    %v326 = vsel %vm325, %v323, 0.0
    %v327 = vsel %vm325, %v324, 0.0
    %v328 = vadd.f32 %v326, %v327
    %329 = vadd.xlane.f32.xlu0 %v328
    %v330 = vpop.xlane.xlu0 %329
    %v331 = vrot.slane %v330, 4
    %v332 = vadd.f32 %v330, %v331
    %v333 = vrot.slane %v332, 2
    %v334 = vadd.f32 %v332, %v333
    %v335 = vrot.slane %v334, 1
    %v336 = vadd.f32 %v334, %v335
    %s337 = vtos %v336
    %v338 = vstv %s337
    %v339 = vadd.f32 %v338, 0.0
    %340 = vst [vmem:[%s5] sm:$0xff] %v339
    // Predicated region
    $region26: #{_forward_with_loss.1} parent=1 // pred_check
      _
    $region27: #{_forward_with_loss.1} parent=1 // pred_check_branch
      %342 = sbr.rel (0) target = $region29
    $region28: #{_forward_with_loss.1} parent=1 // pred_region
      _
    $region29: #{_forward_with_loss.1} parent=1 // pred_fallthru
      _
    // Predicated region
    $region30: #{_forward_with_loss.1} parent=1 // pred_check
      _
    $region31: #{_forward_with_loss.1} parent=1 // pred_check_branch
      %344 = sbr.rel (0) target = $region33
    $region32: #{_forward_with_loss.1} parent=1 // pred_region
      _
    $region33: #{_forward_with_loss.1} parent=1 // pred_fallthru
      _
    // Predicated region
    $region34: #{_forward_with_loss.1} parent=1 // pred_check
      _
    $region35: #{_forward_with_loss.1} parent=1 // pred_check_branch
      %346 = sbr.rel (0) target = $region37
    $region36: #{_forward_with_loss.1} parent=1 // pred_region
      _
    $region37: #{_forward_with_loss.1} parent=1 // pred_fallthru
      _
    // Predicated region
    $region38: #{_forward_with_loss.1} parent=1 // pred_check
      _
    $region39: #{_forward_with_loss.1} parent=1 // pred_check_branch
      %348 = sbr.rel (0) target = $region41
    $region40: #{_forward_with_loss.1} parent=1 // pred_region
      _
    $region41: #{_forward_with_loss.1} parent=1 // pred_fallthru
      _
    %349 = vsyncpa [#allocation3], 1
    %350 = vsyncpa [#allocation5], 1

</llo_original>
